<compile_context>
chip_gen: v7x
topology: tpu7x:2x2x1
jax: 0.10.0
libtpu: 0.0.40
codegen_flags: <defaults>
</compile_context>

<pallas_src>
import functools

import jax
import jax.numpy as jnp
import numpy as np
from jax.experimental import pallas as pl
from jax.experimental.pallas import tpu as pltpu

BLOCK_SIZE = 8   # KV-cache length, as in the reference module
DROPOUT = 0.2    # eval-mode identity at inference time


def _head_decode_kernel(pos0_ref,     # SMEM (1,) int32 : cache position of the first token of this call
                        x_ref,        # VMEM (1, B, C)  : token for grid step t (streamed)
                        w_ref,        # VMEM (3H, C)    : fused [Wq; Wk; Wv] (resident)
                        kc_init_ref,  # VMEM (B, S, H)  : cache state at call entry (resident)
                        vc_init_ref,  # VMEM (B, S, H)
                        out_ref,      # VMEM (1, B, H)  : per-step attention output (streamed)
                        kc_ref,       # VMEM (B, S, H)  : resident cache accumulator, written to
                        vc_ref):      #                   HBM once at the end of the grid
    t = pl.program_id(0)

    # Seed the resident caches from the incoming state once per call.
    @pl.when(t == 0)
    def _():
        kc_ref[...] = kc_init_ref[...]
        vc_ref[...] = vc_init_ref[...]

    B, S, H = kc_ref.shape
    C = x_ref.shape[-1]
    pos = pos0_ref[0] + t                         # absolute cache position of this token

    x = x_ref[0]                                  # (B, C)  float32
    w = w_ref[...]                                # (3H, C) float32

    # Fused q|k|v projection.  At (B, C, 3H) = (2, 32, 48) this is far below
    # MXU tile size, so do it as a VPU broadcast-multiply + lane reduction
    # (exact f32, no tiny MXU pushes, no precision ambiguity).
    qkv = jnp.sum(x[:, None, :] * w[None, :, :], axis=-1)    # (B, 3H)
    q = qkv[:, 0:H]
    k = qkv[:, H:2 * H]
    v = qkv[:, 2 * H:3 * H]

    # k_cache[:, pos] = k ; v_cache[:, pos] = v  -- realized as a register
    # select on the resident VMEM cache (no dynamic-address DMA -> no OOB
    # hazard for any pos); the selected arrays double as the attention K/V.
    row = jax.lax.broadcasted_iota(jnp.int32, (B, S, H), 1)
    is_row = row == pos
    k_all = jnp.where(is_row, k[:, None, :], kc_ref[...])    # (B, S, H)
    v_all = jnp.where(is_row, v[:, None, :], vc_ref[...])
    kc_ref[...] = k_all
    vc_ref[...] = v_all

    # Attention logits.  NOTE: the reference ADDS C**-0.5 (it does not scale).
    scores = jnp.sum(q[:, None, :] * k_all, axis=-1) + jnp.float32(C ** (-0.5))   # (B, S)

    # Only positions 0..pos are valid; equivalent to the reference window
    # cache[:, max(0, pos-S+1):pos+1] for pos < S.  (trill[:1,:1]==0 is
    # all-False, so the causal mask itself is a no-op for T == 1.)
    col = jax.lax.broadcasted_iota(jnp.int32, (B, S), 1)
    scores = jnp.where(col > pos, jnp.float32(-1e30), scores)

    # Softmax over the cache axis (exact divide; S = 8, essentially free).
    m = jnp.max(scores, axis=-1, keepdims=True)
    e = jnp.exp(scores - m)
    wgt = e / jnp.sum(e, axis=-1, keepdims=True)              # (B, S)

    # (dropout omitted -- eval-mode identity)

    # Weighted sum of values (sublane reduction over the S axis).
    out = jnp.sum(wgt[:, :, None] * v_all, axis=1)            # (B, H)
    out_ref[0] = out.astype(out_ref.dtype)


@functools.partial(jax.jit, donate_argnums=(3, 4))
def head_decode(x_steps, pos0, w_fused, k_cache, v_cache):
    """Runs n_steps incremental-decode steps of `Head` in ONE pallas_call.

    x_steps : (n_steps, B, C)   tokens for positions pos0 .. pos0+n_steps-1
    pos0    : int32 scalar      cache position of x_steps[0]
    w_fused : (3H, C)           jnp.concatenate([Wq, Wk, Wv], axis=0)
    k_cache, v_cache : (B, S, H) cache state (donated, updated in place)

    Returns (out, k_cache, v_cache) with out of shape (n_steps, B, H).
    """
    n_steps, B, C = x_steps.shape
    _, S, H = k_cache.shape
    pos0_arr = jnp.reshape(jnp.asarray(pos0, dtype=jnp.int32), (1,))

    out, kc_new, vc_new = pl.pallas_call(
        _head_decode_kernel,
        grid=(n_steps,),
        in_specs=[
            pl.BlockSpec(memory_space=pltpu.MemorySpace.SMEM),     # pos0
            pl.BlockSpec((1, B, C), lambda t: (t, 0, 0)),          # x (streamed per step)
            pl.BlockSpec((3 * H, C), lambda t: (0, 0)),            # fused weight (resident)
            pl.BlockSpec((B, S, H), lambda t: (0, 0, 0)),          # k_cache in (resident)
            pl.BlockSpec((B, S, H), lambda t: (0, 0, 0)),          # v_cache in (resident)
        ],
        out_specs=(
            pl.BlockSpec((1, B, H), lambda t: (t, 0, 0)),          # per-step output
            pl.BlockSpec((B, S, H), lambda t: (0, 0, 0)),          # k_cache out (resident)
            pl.BlockSpec((B, S, H), lambda t: (0, 0, 0)),          # v_cache out (resident)
        ),
        out_shape=(
            jax.ShapeDtypeStruct((n_steps, B, H), x_steps.dtype),
            jax.ShapeDtypeStruct((B, S, H), k_cache.dtype),
            jax.ShapeDtypeStruct((B, S, H), v_cache.dtype),
        ),
        # Decode steps are sequentially dependent through the cache.
        compiler_params=pltpu.CompilerParams(
            dimension_semantics=("arbitrary",)),
        # KV caches updated in place: one HBM buffer, one cache writeback per
        # CALL (not per token); pairs with donate_argnums above.
        input_output_aliases={3: 1, 4: 2},
    )(pos0_arr, x_steps, w_fused, k_cache, v_cache)
    return out, kc_new, vc_new


def _reference_step(x, pos, wk, wq, wv, k_cache, v_cache):
    """Exact-f32 numpy port of the PyTorch Head.forward for one decode step."""
    B, T, C = x.shape
    k = x @ wk.T                                   # (B, 1, H)
    q = x @ wq.T
    v = x @ wv.T
    k_cache = k_cache.copy()
    v_cache = v_cache.copy()
    k_cache[:, pos:pos + 1] = k
    v_cache[:, pos:pos + 1] = v
    lo = max(0, pos - BLOCK_SIZE + 1)
    key = k_cache[:, lo:pos + 1]
    value = v_cache[:, lo:pos + 1]
    w = q @ np.swapaxes(key, -2, -1) + C ** (-0.5)   # additive quirk preserved
    # trill[:1, :1] == 0 is all-False -> masked_fill is a no-op for T == 1
    w = w - w.max(axis=-1, keepdims=True)
    w = np.exp(w)
    w = w / w.sum(axis=-1, keepdims=True)
    out = w @ value
    return out, k_cache, v_cache


if __name__ == "__main__":
    BATCH_SIZE = 2
    N_EMBED = 32
    HEAD_SIZE = 16
    N_STEPS = 8           # total decode steps (== BLOCK_SIZE)
    CHUNK = 4             # decode steps fused into each pallas_call

    key = jax.random.PRNGKey(0)
    k_wk, k_wq, k_wv, k_x = jax.random.split(key, 4)

    # nn.Linear(n_embed, head_size, bias=False) weights, shape (H, C).
    wk = jax.random.normal(k_wk, (HEAD_SIZE, N_EMBED), jnp.float32) * 0.1
    wq = jax.random.normal(k_wq, (HEAD_SIZE, N_EMBED), jnp.float32) * 0.1
    wv = jax.random.normal(k_wv, (HEAD_SIZE, N_EMBED), jnp.float32) * 0.1

    # Token stream: x_t has the module's (B, T=1, C) shape at every step.
    xs = jax.random.normal(k_x, (N_STEPS, BATCH_SIZE, 1, N_EMBED), jnp.float32)

    # Fused projection weight, built ONCE outside the decode loop
    # ([Wq; Wk; Wv] stacked along the output axis -- no per-step transposes).
    w_fused = jnp.concatenate([wq, wk, wv], axis=0)            # (3H, C)

    k_cache = jnp.zeros((BATCH_SIZE, BLOCK_SIZE, HEAD_SIZE), jnp.float32)
    v_cache = jnp.zeros((BATCH_SIZE, BLOCK_SIZE, HEAD_SIZE), jnp.float32)

    # ---- Pallas: N_STEPS decode steps in N_STEPS // CHUNK kernel launches ----
    outs = []
    for start in range(0, N_STEPS, CHUNK):
        x_chunk = xs[start:start + CHUNK, :, 0, :]             # (CHUNK, B, C)
        out_chunk, k_cache, v_cache = head_decode(
            x_chunk, jnp.int32(start), w_fused, k_cache, v_cache)
        outs.append(out_chunk)
    out_all = jax.block_until_ready(jnp.concatenate(outs, axis=0))   # (N_STEPS, B, H)

    # ---- exact-f32 numpy reference, one token at a time ----
    wk_np, wq_np, wv_np = np.asarray(wk), np.asarray(wq), np.asarray(wv)
    xs_np = np.asarray(xs)
    kc_ref = np.zeros((BATCH_SIZE, BLOCK_SIZE, HEAD_SIZE), np.float32)
    vc_ref = np.zeros((BATCH_SIZE, BLOCK_SIZE, HEAD_SIZE), np.float32)

    out_np = np.asarray(out_all)
    ok = True
    for pos in range(N_STEPS):
        o_ref, kc_ref, vc_ref = _reference_step(
            xs_np[pos], pos, wk_np, wq_np, wv_np, kc_ref, vc_ref)
        ok &= bool(np.allclose(out_np[pos], o_ref[:, 0, :], atol=1e-3, rtol=1e-3))
    ok &= bool(np.allclose(np.asarray(k_cache), kc_ref, atol=1e-4, rtol=1e-4))
    ok &= bool(np.allclose(np.asarray(v_cache), vc_ref, atol=1e-4, rtol=1e-4))

    if ok:
        print("KERNEL_OK")
    else:
        print("MISMATCH")
</pallas_src>

<mosaic_0001>
module attributes {stable_mosaic.version = 11 : i64} {
  func.func @_head_decode_kernel(%arg0: i32, %arg1: memref<1xi32, #tpu.memory_space<smem>>, %arg2: memref<1x2x32xf32, #tpu.memory_space<vmem>>, %arg3: memref<48x32xf32, #tpu.memory_space<vmem>>, %arg4: memref<2x8x16xf32, #tpu.memory_space<vmem>>, %arg5: memref<2x8x16xf32, #tpu.memory_space<vmem>>, %arg6: memref<1x2x16xf32, #tpu.memory_space<vmem>>, %arg7: memref<2x8x16xf32, #tpu.memory_space<vmem>>, %arg8: memref<2x8x16xf32, #tpu.memory_space<vmem>>) attributes {dimension_semantics = [#tpu.dimension_semantics<arbitrary>], iteration_bounds = array<i64: 4>, scalar_prefetch = 0 : i64, scratch_operands = 0 : i64, tpu.core_type = #tpu.core_type<tc>, window_params = [{transform_indices = @transform_0, window_bounds = array<i64: 1>}, {transform_indices = @transform_1, window_bounds = array<i64: 1, 2, 32>}, {pipeline_mode = #tpu.pipeline_mode<synchronous>, transform_indices = @transform_2, window_bounds = array<i64: 48, 32>}, {pipeline_mode = #tpu.pipeline_mode<synchronous>, transform_indices = @transform_3, window_bounds = array<i64: 2, 8, 16>}, {pipeline_mode = #tpu.pipeline_mode<synchronous>, transform_indices = @transform_4, window_bounds = array<i64: 2, 8, 16>}, {transform_indices = @transform_5, window_bounds = array<i64: 1, 2, 16>}, {pipeline_mode = #tpu.pipeline_mode<synchronous>, transform_indices = @transform_6, window_bounds = array<i64: 2, 8, 16>}, {pipeline_mode = #tpu.pipeline_mode<synchronous>, transform_indices = @transform_7, window_bounds = array<i64: 2, 8, 16>}]} {
    %c0_i32 = arith.constant 0 : i32
    %0 = arith.cmpi eq, %arg0, %c0_i32 : i32
    %1 = arith.extui %0 : i1 to i32
    %c0_i32_0 = arith.constant 0 : i32
    %2 = arith.cmpi ne, %1, %c0_i32_0 : i32
    scf.if %2 {
      %c0_27 = arith.constant 0 : index
      %c0_28 = arith.constant 0 : index
      %c0_29 = arith.constant 0 : index
      %59 = vector.load %arg4[%c0_27, %c0_28, %c0_29] : memref<2x8x16xf32, #tpu.memory_space<vmem>>, vector<2x8x16xf32>
      %c0_30 = arith.constant 0 : index
      %c0_31 = arith.constant 0 : index
      %c0_32 = arith.constant 0 : index
      %60 = vector.load %arg7[%c0_30, %c0_31, %c0_32] : memref<2x8x16xf32, #tpu.memory_space<vmem>>, vector<2x8x16xf32>
      tpu.vector_store %arg7[%c0_30, %c0_31, %c0_32], %59 {strides = array<i32>} : memref<2x8x16xf32, #tpu.memory_space<vmem>>, vector<2x8x16xf32>,
      %c0_33 = arith.constant 0 : index
      %c0_34 = arith.constant 0 : index
      %c0_35 = arith.constant 0 : index
      %61 = vector.load %arg5[%c0_33, %c0_34, %c0_35] : memref<2x8x16xf32, #tpu.memory_space<vmem>>, vector<2x8x16xf32>
      %c0_36 = arith.constant 0 : index
      %c0_37 = arith.constant 0 : index
      %c0_38 = arith.constant 0 : index
      %62 = vector.load %arg8[%c0_36, %c0_37, %c0_38] : memref<2x8x16xf32, #tpu.memory_space<vmem>>, vector<2x8x16xf32>
      tpu.vector_store %arg8[%c0_36, %c0_37, %c0_38], %61 {strides = array<i32>} : memref<2x8x16xf32, #tpu.memory_space<vmem>>, vector<2x8x16xf32>,
    } else {
    }
    %c0 = arith.constant 0 : index
    %3 = memref.load %arg1[%c0] : memref<1xi32, #tpu.memory_space<smem>>
    %4 = arith.addi %3, %arg0 : i32
    %c0_1 = arith.constant 0 : index
    %c0_2 = arith.constant 0 : index
    %c0_3 = arith.constant 0 : index
    %5 = vector.load %arg2[%c0_1, %c0_2, %c0_3] : memref<1x2x32xf32, #tpu.memory_space<vmem>>, vector<1x2x32xf32>
    %6 = vector.shape_cast %5 : vector<1x2x32xf32> to vector<2x32xf32>
    %c0_4 = arith.constant 0 : index
    %c0_5 = arith.constant 0 : index
    %7 = vector.load %arg3[%c0_4, %c0_5] : memref<48x32xf32, #tpu.memory_space<vmem>>, vector<48x32xf32>
    %8 = vector.shape_cast %6 : vector<2x32xf32> to vector<2x1x32xf32>
    %9 = vector.shape_cast %7 : vector<48x32xf32> to vector<1x48x32xf32>
    %10 = vector.broadcast %8 : vector<2x1x32xf32> to vector<2x48x32xf32>
    %11 = vector.broadcast %9 : vector<1x48x32xf32> to vector<2x48x32xf32>
    %12 = arith.mulf %10, %11 : vector<2x48x32xf32>
    %cst = arith.constant dense<0.000000e+00> : vector<2x48xf32>
    %13 = vector.multi_reduction <add>, %12, %cst [2] : vector<2x48x32xf32> to vector<2x48xf32>
    %14 = vector.extract_strided_slice %13 {offsets = [0, 0], sizes = [2, 16], strides = [1, 1]} : vector<2x48xf32> to vector<2x16xf32>
    %15 = vector.extract_strided_slice %13 {offsets = [0, 16], sizes = [2, 16], strides = [1, 1]} : vector<2x48xf32> to vector<2x16xf32>
    %16 = vector.extract_strided_slice %13 {offsets = [0, 32], sizes = [2, 16], strides = [1, 1]} : vector<2x48xf32> to vector<2x16xf32>
    %17 = tpu.iota {dimensions = array<i32: 1>} : vector<2x8x16xi32>
    %18 = vector.broadcast %4 : i32 to vector<2x8x16xi32>
    %19 = arith.cmpi eq, %17, %18 : vector<2x8x16xi32>
    %20 = vector.shape_cast %15 : vector<2x16xf32> to vector<2x1x16xf32>
    %c0_6 = arith.constant 0 : index
    %c0_7 = arith.constant 0 : index
    %c0_8 = arith.constant 0 : index
    %21 = vector.load %arg7[%c0_6, %c0_7, %c0_8] : memref<2x8x16xf32, #tpu.memory_space<vmem>>, vector<2x8x16xf32>
    %22 = vector.shape_cast %20 : vector<2x1x16xf32> to vector<2x1x16xf32>
    %23 = vector.broadcast %22 : vector<2x1x16xf32> to vector<2x8x16xf32>
    %24 = arith.select %19, %23, %21 : vector<2x8x16xi1>, vector<2x8x16xf32>
    %25 = vector.shape_cast %16 : vector<2x16xf32> to vector<2x1x16xf32>
    %c0_9 = arith.constant 0 : index
    %c0_10 = arith.constant 0 : index
    %c0_11 = arith.constant 0 : index
    %26 = vector.load %arg8[%c0_9, %c0_10, %c0_11] : memref<2x8x16xf32, #tpu.memory_space<vmem>>, vector<2x8x16xf32>
    %27 = vector.shape_cast %25 : vector<2x1x16xf32> to vector<2x1x16xf32>
    %28 = vector.broadcast %27 : vector<2x1x16xf32> to vector<2x8x16xf32>
    %29 = arith.select %19, %28, %26 : vector<2x8x16xi1>, vector<2x8x16xf32>
    %c0_12 = arith.constant 0 : index
    %c0_13 = arith.constant 0 : index
    %c0_14 = arith.constant 0 : index
    %30 = vector.load %arg7[%c0_12, %c0_13, %c0_14] : memref<2x8x16xf32, #tpu.memory_space<vmem>>, vector<2x8x16xf32>
    tpu.vector_store %arg7[%c0_12, %c0_13, %c0_14], %24 {strides = array<i32>} : memref<2x8x16xf32, #tpu.memory_space<vmem>>, vector<2x8x16xf32>,
    %c0_15 = arith.constant 0 : index
    %c0_16 = arith.constant 0 : index
    %c0_17 = arith.constant 0 : index
    %31 = vector.load %arg8[%c0_15, %c0_16, %c0_17] : memref<2x8x16xf32, #tpu.memory_space<vmem>>, vector<2x8x16xf32>
    tpu.vector_store %arg8[%c0_15, %c0_16, %c0_17], %29 {strides = array<i32>} : memref<2x8x16xf32, #tpu.memory_space<vmem>>, vector<2x8x16xf32>,
    %32 = vector.shape_cast %14 : vector<2x16xf32> to vector<2x1x16xf32>
    %33 = vector.broadcast %32 : vector<2x1x16xf32> to vector<2x8x16xf32>
    %34 = arith.mulf %33, %24 : vector<2x8x16xf32>
    %cst_18 = arith.constant dense<0.000000e+00> : vector<2x8xf32>
    %35 = vector.multi_reduction <add>, %34, %cst_18 [2] : vector<2x8x16xf32> to vector<2x8xf32>
    %cst_19 = arith.constant 0.176776692 : f32
    %36 = vector.broadcast %cst_19 : f32 to vector<2x8xf32>
    %37 = arith.addf %35, %36 : vector<2x8xf32>
    %38 = tpu.iota {dimensions = array<i32: 1>} : vector<2x8xi32>
    %39 = vector.broadcast %4 : i32 to vector<2x8xi32>
    %40 = arith.cmpi sgt, %38, %39 : vector<2x8xi32>
    %cst_20 = arith.constant -1.000000e+30 : f32
    %41 = vector.broadcast %cst_20 : f32 to vector<2x8xf32>
    %42 = arith.select %40, %41, %37 : vector<2x8xi1>, vector<2x8xf32>
    %cst_21 = arith.constant dense<0xFF800000> : vector<2xf32>
    %43 = vector.multi_reduction <maximumf>, %42, %cst_21 [1] : vector<2x8xf32> to vector<2xf32>
    %44 = vector.shape_cast %43 : vector<2xf32> to vector<2x1xf32>
    %45 = vector.broadcast %44 : vector<2x1xf32> to vector<2x8xf32>
    %46 = arith.subf %42, %45 : vector<2x8xf32>
    %47 = math.exp %46 : vector<2x8xf32>
    %cst_22 = arith.constant dense<0.000000e+00> : vector<2xf32>
    %48 = vector.multi_reduction <add>, %47, %cst_22 [1] : vector<2x8xf32> to vector<2xf32>
    %49 = vector.shape_cast %48 : vector<2xf32> to vector<2x1xf32>
    %50 = vector.broadcast %49 : vector<2x1xf32> to vector<2x8xf32>
    %51 = arith.divf %47, %50 : vector<2x8xf32>
    %52 = vector.shape_cast %51 : vector<2x8xf32> to vector<2x8x1xf32>
    %53 = vector.broadcast %52 : vector<2x8x1xf32> to vector<2x8x16xf32>
    %54 = arith.mulf %53, %29 : vector<2x8x16xf32>
    %cst_23 = arith.constant dense<0.000000e+00> : vector<2x16xf32>
    %55 = vector.multi_reduction <add>, %54, %cst_23 [1] : vector<2x8x16xf32> to vector<2x16xf32>
    %c0_24 = arith.constant 0 : index
    %c0_25 = arith.constant 0 : index
    %c0_26 = arith.constant 0 : index
    %56 = vector.load %arg6[%c0_24, %c0_25, %c0_26] : memref<1x2x16xf32, #tpu.memory_space<vmem>>, vector<1x2x16xf32>
    %57 = vector.shape_cast %56 : vector<1x2x16xf32> to vector<2x16xf32>
    %58 = vector.shape_cast %55 : vector<2x16xf32> to vector<1x2x16xf32>
    tpu.vector_store %arg6[%c0_24, %c0_25, %c0_26], %58 {strides = array<i32>} : memref<1x2x16xf32, #tpu.memory_space<vmem>>, vector<1x2x16xf32>,
    return
  }
  func.func @transform_0(%arg0: i32) -> i32 {
    %c0_i32 = arith.constant 0 : i32
    %c0_i32_0 = arith.constant 0 : i32
    return %c0_i32 : i32
  }
  func.func @transform_1(%arg0: i32) -> (i32, i32, i32) {
    %c0_i32 = arith.constant 0 : i32
    %c0_i32_0 = arith.constant 0 : i32
    %c0_i32_1 = arith.constant 0 : i32
    return %arg0, %c0_i32, %c0_i32_0 : i32, i32, i32
  }
  func.func @transform_2(%arg0: i32) -> (i32, i32) {
    %c0_i32 = arith.constant 0 : i32
    %c0_i32_0 = arith.constant 0 : i32
    %c0_i32_1 = arith.constant 0 : i32
    return %c0_i32, %c0_i32_0 : i32, i32
  }
  func.func @transform_3(%arg0: i32) -> (i32, i32, i32) {
    %c0_i32 = arith.constant 0 : i32
    %c0_i32_0 = arith.constant 0 : i32
    %c0_i32_1 = arith.constant 0 : i32
    %c0_i32_2 = arith.constant 0 : i32
    return %c0_i32, %c0_i32_0, %c0_i32_1 : i32, i32, i32
  }
  func.func @transform_4(%arg0: i32) -> (i32, i32, i32) {
    %c0_i32 = arith.constant 0 : i32
    %c0_i32_0 = arith.constant 0 : i32
    %c0_i32_1 = arith.constant 0 : i32
    %c0_i32_2 = arith.constant 0 : i32
    return %c0_i32, %c0_i32_0, %c0_i32_1 : i32, i32, i32
  }
  func.func @transform_5(%arg0: i32) -> (i32, i32, i32) {
    %c0_i32 = arith.constant 0 : i32
    %c0_i32_0 = arith.constant 0 : i32
    %c0_i32_1 = arith.constant 0 : i32
    return %arg0, %c0_i32, %c0_i32_0 : i32, i32, i32
  }
  func.func @transform_6(%arg0: i32) -> (i32, i32, i32) {
    %c0_i32 = arith.constant 0 : i32
    %c0_i32_0 = arith.constant 0 : i32
    %c0_i32_1 = arith.constant 0 : i32
    %c0_i32_2 = arith.constant 0 : i32
    return %c0_i32, %c0_i32_0, %c0_i32_1 : i32, i32, i32
  }
  func.func @transform_7(%arg0: i32) -> (i32, i32, i32) {
    %c0_i32 = arith.constant 0 : i32
    %c0_i32_0 = arith.constant 0 : i32
    %c0_i32_1 = arith.constant 0 : i32
    %c0_i32_2 = arith.constant 0 : i32
    return %c0_i32, %c0_i32_0, %c0_i32_1 : i32, i32, i32
  }
}

</mosaic_0001>

<llo_original>
// kernel: head_decode.1
$region0: #{head_decode.1}
  #allocation0 [shape = 'u32[]', space=smem, size = 0x4, offset = 0x4, fixed_abs, tag = 'smem constant byte address 0x4 - core index']
  #allocation1 [shape = 'u32[144,128]{1,0:T(1,128)}', space=vmem, size = 0x12000, scoped, tag = 'internal scratch']
  #allocation2 [shape = 's32[1]{0:T(128)S(6)}', space=smem, size = 0x200, scoped, tag = 'scoped memory for head_decode.1']
  %s0 = inlined_call_operand.<no memory space> [shape: s32[1], index: 0, kind: input, shape index: {}]
  %s1 = inlined_call_operand.vmem [shape: f32[4,2,32], index: 1, kind: input, shape index: {}]
  %s2 = inlined_call_operand.vmem [shape: f32[48,32], index: 2, kind: input, shape index: {}]
  %s3 = inlined_call_operand.hbm [shape: f32[2,8,16], index: 3, kind: input, shape index: {}, may-alias: {3,6}]
  %s4 = inlined_call_operand.hbm [shape: f32[2,8,16], index: 4, kind: input, shape index: {}, may-alias: {4,7}]
  %s5 = inlined_call_operand.hbm [shape: f32[4,2,16], index: 5, kind: output, shape index: {0}]
  %s6 = inlined_call_operand.hbm [shape: f32[2,8,16], index: 6, kind: output, shape index: {1}, may-alias: {3,6}]
  %s7 = inlined_call_operand.hbm [shape: f32[2,8,16], index: 7, kind: output, shape index: {2}, may-alias: {4,7}]
  %8 = xla_tuple %s5, %s6, %s7
  %s9 = sld [smem:[#allocation0]]
  $region81: #{head_decode.1} parent=0
    _
  %s11 = ssub.s32 1, %s9
  %s12 = scalar_select 0, %s11, %s9
  %13 = sst [smem:[#allocation2]] %s0
  $region1: #{head_decode.1} parent=0
    #allocation3 [shape = 'u8[8192]{0}', space=vmem, size = 0x2000, scoped, tag = 'input window, operand 3, single buffered']
    #allocation4 [shape = 's32[2]{0}', space=sflag, size = 0x8, scoped, tag = 'scoped memory for head_decode.1']
    #allocation5 [shape = 's32[2]{0}', space=sflag, size = 0x8, scoped, tag = 'scoped memory for head_decode.1']
    #allocation6 [shape = 'u8[8192]{0}', space=vmem, size = 0x2000, scoped, tag = 'input window, operand 4, single buffered']
    #allocation7 [shape = 's32[1]{0}', space=sflag, size = 0x4, scoped, tag = 'scoped memory for head_decode.1']
    #allocation8 [shape = 'u8[2048]{0}', space=vmem, size = 0x800, scoped, tag = 'output window, operand 0']
    #allocation9 [shape = 'u8[8192]{0}', space=vmem, size = 0x2000, scoped, tag = 'output window, operand 1, single buffered']
    #allocation10 [shape = 's32[1]{0}', space=sflag, size = 0x4, scoped, tag = 'scoped memory for head_decode.1']
    #allocation11 [shape = 'u8[8192]{0}', space=vmem, size = 0x2000, scoped, tag = 'output window, operand 2, single buffered']
    %14 = vsyncpa [#allocation4], 0
    %15 = vsyncpa [#allocation7], 0
    %16 = vsyncpa [#allocation5], 0
    %s17 = scalar_lea.sflag [#allocation5], 1
    %18 = vsyncpa %s17, 0
    %19 = vsyncpa [#allocation10], 0
    loop: start=0, step=1, limit=6
    $region2: #{head_decode.1} parent=1 // loop_pre_header
      _
    $region3: #{head_decode.1} parent=1 // loop_header
      %s21 = sphi 0, %s25
      %p22 = scmp.ge.s32.totalorder %s21, 6
      %s29 = sphi 0, %s29
      %s31 = sphi 0, %s29
      %s32 = sphi 0, %s31
      %s46 = sphi 0, %s32
      %s52 = sphi 0, %s54
      %s55 = sphi 0, %s52
      %s56 = sphi 0, %s55
      %s72 = sphi 0, %s56
      %s76 = sphi 0, %s76
      %s78 = sphi 0, %s76
      %s79 = sphi 0, %s78
      %s93 = sphi 0, %s79
      %s97 = sphi 0, %s97
      %s99 = sphi 0, %s97
      %s100 = sphi 0, %s99
      %s114 = sphi 0, %s100
      %s118 = sphi 0, %s118
      %s120 = sphi 0, %s118
      %s121 = sphi 0, %s120
      %s135 = sphi 0, %s121
      %s141 = sphi 0, %s143
      %s144 = sphi 0, %s141
      %s145 = sphi 0, %s144
      %s161 = sphi 0, %s145
      %s165 = sphi 0, %s165
      %s167 = sphi 0, %s165
      %s168 = sphi 0, %s167
      %s182 = sphi 0, %s168
      %s186 = sphi 0, %s186
      %s188 = sphi 0, %s186
      %s189 = sphi 0, %s188
      %s203 = sphi 0, %s189
    $region4: #{head_decode.1} parent=1 // loop_header_branch
      %24 = sbr.rel (%p22) target = $region8
    $region5: #{head_decode.1} parent=1 // loop_body
      %s26 = ssub.s32 %s21, 1
      %s27 = ssub.s32 %s21, 2
      %s28 = sadd.s32 %s21, 1
      %s30 = sadd.s32 %s29, 1
      %p33 = scmp.eq.s32.totalorder %s21, 3
      %p34 = scmp.ne.s32.totalorder %s29, %s31
      %p35 = scmp.eq.s32.totalorder %s21, 0
      %p36 = por %p34, %p35
      %p37 = scmp.ne.s32.totalorder %s29, %s31
      %p38 = scmp.eq.s32.totalorder %s26, 3
      %p39 = por %p37, %p38
      %p40 = scmp.ne.s32.totalorder %s31, %s32
      %p41 = scmp.eq.s32.totalorder %s26, 0
      %p42 = por %p40, %p41
      %p43 = scmp.ne.s32.totalorder %s31, %s32
      %p44 = scmp.eq.s32.totalorder %s27, 3
      %p45 = por %p43, %p44
      %p47 = scmp.ne.s32.totalorder %s32, %s46
      %p48 = scmp.eq.s32.totalorder %s27, 0
      %p49 = por %p47, %p48
      %s50 = ssub.s32 %s21, %s28
      %p51 = scmp.eq.s32.totalorder %s50, 0
      %s53 = sadd.s32 %s52, 1
      %s54 = scalar_select %p51, %s52, %s53
      %p57 = pneg %p51
      %p58 = scmp.eq.s32.totalorder %s21, 3
      %p59 = por %p57, %p58
      %p60 = scmp.ne.s32.totalorder %s52, %s55
      %p61 = scmp.eq.s32.totalorder %s21, 0
      %p62 = por %p60, %p61
      %p63 = scmp.ne.s32.totalorder %s52, %s55
      %p64 = scmp.eq.s32.totalorder %s26, 3
      %p65 = por %p63, %p64
      %p66 = scmp.ne.s32.totalorder %s55, %s56
      %p67 = scmp.eq.s32.totalorder %s26, 0
      %p68 = por %p66, %p67
      %p69 = scmp.ne.s32.totalorder %s55, %s56
      %p70 = scmp.eq.s32.totalorder %s27, 3
      %p71 = por %p69, %p70
      %p73 = scmp.ne.s32.totalorder %s56, %s72
      %p74 = scmp.eq.s32.totalorder %s27, 0
      %p75 = por %p73, %p74
      %s77 = sadd.s32 %s76, 1
      %p80 = scmp.eq.s32.totalorder %s21, 3
      %p81 = scmp.ne.s32.totalorder %s76, %s78
      %p82 = scmp.eq.s32.totalorder %s21, 0
      %p83 = por %p81, %p82
      %p84 = scmp.ne.s32.totalorder %s76, %s78
      %p85 = scmp.eq.s32.totalorder %s26, 3
      %p86 = por %p84, %p85
      %p87 = scmp.ne.s32.totalorder %s78, %s79
      %p88 = scmp.eq.s32.totalorder %s26, 0
      %p89 = por %p87, %p88
      %p90 = scmp.ne.s32.totalorder %s78, %s79
      %p91 = scmp.eq.s32.totalorder %s27, 3
      %p92 = por %p90, %p91
      %p94 = scmp.ne.s32.totalorder %s79, %s93
      %p95 = scmp.eq.s32.totalorder %s27, 0
      %p96 = por %p94, %p95
      %s98 = sadd.s32 %s97, 1
      %p101 = scmp.eq.s32.totalorder %s21, 3
      %p102 = scmp.ne.s32.totalorder %s97, %s99
      %p103 = scmp.eq.s32.totalorder %s21, 0
      %p104 = por %p102, %p103
      %p105 = scmp.ne.s32.totalorder %s97, %s99
      %p106 = scmp.eq.s32.totalorder %s26, 3
      %p107 = por %p105, %p106
      %p108 = scmp.ne.s32.totalorder %s99, %s100
      %p109 = scmp.eq.s32.totalorder %s26, 0
      %p110 = por %p108, %p109
      %p111 = scmp.ne.s32.totalorder %s99, %s100
      %p112 = scmp.eq.s32.totalorder %s27, 3
      %p113 = por %p111, %p112
      %p115 = scmp.ne.s32.totalorder %s100, %s114
      %p116 = scmp.eq.s32.totalorder %s27, 0
      %p117 = por %p115, %p116
      %s119 = sadd.s32 %s118, 1
      %p122 = scmp.eq.s32.totalorder %s21, 3
      %p123 = scmp.ne.s32.totalorder %s118, %s120
      %p124 = scmp.eq.s32.totalorder %s21, 0
      %p125 = por %p123, %p124
      %p126 = scmp.ne.s32.totalorder %s118, %s120
      %p127 = scmp.eq.s32.totalorder %s26, 3
      %p128 = por %p126, %p127
      %p129 = scmp.ne.s32.totalorder %s120, %s121
      %p130 = scmp.eq.s32.totalorder %s26, 0
      %p131 = por %p129, %p130
      %p132 = scmp.ne.s32.totalorder %s120, %s121
      %p133 = scmp.eq.s32.totalorder %s27, 3
      %p134 = por %p132, %p133
      %p136 = scmp.ne.s32.totalorder %s121, %s135
      %p137 = scmp.eq.s32.totalorder %s27, 0
      %p138 = por %p136, %p137
      %s139 = ssub.s32 %s21, %s28
      %p140 = scmp.eq.s32.totalorder %s139, 0
      %s142 = sadd.s32 %s141, 1
      %s143 = scalar_select %p140, %s141, %s142
      %p146 = pneg %p140
      %p147 = scmp.eq.s32.totalorder %s21, 3
      %p148 = por %p146, %p147
      %p149 = scmp.ne.s32.totalorder %s141, %s144
      %p150 = scmp.eq.s32.totalorder %s21, 0
      %p151 = por %p149, %p150
      %p152 = scmp.ne.s32.totalorder %s141, %s144
      %p153 = scmp.eq.s32.totalorder %s26, 3
      %p154 = por %p152, %p153
      %p155 = scmp.ne.s32.totalorder %s144, %s145
      %p156 = scmp.eq.s32.totalorder %s26, 0
      %p157 = por %p155, %p156
      %p158 = scmp.ne.s32.totalorder %s144, %s145
      %p159 = scmp.eq.s32.totalorder %s27, 3
      %p160 = por %p158, %p159
      %p162 = scmp.ne.s32.totalorder %s145, %s161
      %p163 = scmp.eq.s32.totalorder %s27, 0
      %p164 = por %p162, %p163
      %s166 = sadd.s32 %s165, 1
      %p169 = scmp.eq.s32.totalorder %s21, 3
      %p170 = scmp.ne.s32.totalorder %s165, %s167
      %p171 = scmp.eq.s32.totalorder %s21, 0
      %p172 = por %p170, %p171
      %p173 = scmp.ne.s32.totalorder %s165, %s167
      %p174 = scmp.eq.s32.totalorder %s26, 3
      %p175 = por %p173, %p174
      %p176 = scmp.ne.s32.totalorder %s167, %s168
      %p177 = scmp.eq.s32.totalorder %s26, 0
      %p178 = por %p176, %p177
      %p179 = scmp.ne.s32.totalorder %s167, %s168
      %p180 = scmp.eq.s32.totalorder %s27, 3
      %p181 = por %p179, %p180
      %p183 = scmp.ne.s32.totalorder %s168, %s182
      %p184 = scmp.eq.s32.totalorder %s27, 0
      %p185 = por %p183, %p184
      %s187 = sadd.s32 %s186, 1
      %p190 = scmp.eq.s32.totalorder %s21, 3
      %p191 = scmp.ne.s32.totalorder %s186, %s188
      %p192 = scmp.eq.s32.totalorder %s21, 0
      %p193 = por %p191, %p192
      %p194 = scmp.ne.s32.totalorder %s186, %s188
      %p195 = scmp.eq.s32.totalorder %s26, 3
      %p196 = por %p194, %p195
      %p197 = scmp.ne.s32.totalorder %s188, %s189
      %p198 = scmp.eq.s32.totalorder %s26, 0
      %p199 = por %p197, %p198
      %p200 = scmp.ne.s32.totalorder %s188, %s189
      %p201 = scmp.eq.s32.totalorder %s27, 3
      %p202 = por %p200, %p201
      %p204 = scmp.ne.s32.totalorder %s189, %s203
      %p205 = scmp.eq.s32.totalorder %s27, 0
      %p206 = por %p204, %p205
      %p207 = scmp.le.s32.totalorder 1, %s21
      %p208 = scmp.lt.s32.totalorder %s21, 5
      %p209 = pnand %p207, %p208
      %p210 = pneg %p209
      // Predicated region
      $region9: #{head_decode.1} parent=5 // pred_check
        _
      $region10: #{head_decode.1} parent=5 // pred_check_branch
        %212 = sbr.rel (%p209) target = $region12
      $region11: #{head_decode.1} parent=5 // pred_region
        %s213 = ssub.s32 %s21, 1
        // Predicated region
        $region13: #{head_decode.1} parent=11 // pred_check
          %p214 = pneg %p42
        $region14: #{head_decode.1} parent=11 // pred_check_branch
          %216 = sbr.rel (%p214) target = $region16
        $region15: #{head_decode.1} parent=11 // pred_region
          _
        $region16: #{head_decode.1} parent=11 // pred_fallthru
          _
        // Predicated region
        $region17: #{head_decode.1} parent=11 // pred_check
          %p217 = pneg %p89
        $region18: #{head_decode.1} parent=11 // pred_check_branch
          %219 = sbr.rel (%p217) target = $region20
        $region19: #{head_decode.1} parent=11 // pred_region
          _
        $region20: #{head_decode.1} parent=11 // pred_fallthru
          _
        // Predicated region
        $region21: #{head_decode.1} parent=11 // pred_check
          %p220 = pneg %p110
        $region22: #{head_decode.1} parent=11 // pred_check_branch
          %222 = sbr.rel (%p220) target = $region24
        $region23: #{head_decode.1} parent=11 // pred_region
          %s224 = ssub.s32 256, 256
          %225 = vsyncadd [#allocation4], %s224
          %s226 = sshll.u32 [#allocation3], 4
          %s227 = int_to_ptr.vmem [resolvable:$true] %s226
          %232 = dma.hbm_to_vmem [thread:$0]  %s3, 256, %s227, [#allocation4], 128, 128, 8
        $region24: #{head_decode.1} parent=11 // pred_fallthru
          _
        // Predicated region
        $region25: #{head_decode.1} parent=11 // pred_check
          %p233 = pneg %p131
        $region26: #{head_decode.1} parent=11 // pred_check_branch
          %235 = sbr.rel (%p233) target = $region28
        $region27: #{head_decode.1} parent=11 // pred_region
          %s237 = ssub.s32 256, 256
          %238 = vsyncadd [#allocation7], %s237
          %s239 = sshll.u32 [#allocation6], 4
          %s240 = int_to_ptr.vmem [resolvable:$true] %s239
          %245 = dma.hbm_to_vmem [thread:$0]  %s4, 256, %s240, [#allocation7], 128, 128, 8
        $region28: #{head_decode.1} parent=11 // pred_fallthru
          _
      $region12: #{head_decode.1} parent=5 // pred_fallthru
        _
      %p246 = scmp.lt.s32.totalorder %s21, 4
      // Predicated region
      $region29: #{head_decode.1} parent=5 // pred_check
        %p247 = pneg %p246
      $region30: #{head_decode.1} parent=5 // pred_check_branch
        %249 = sbr.rel (%p247) target = $region32
      $region31: #{head_decode.1} parent=5 // pred_region
        // Predicated region
        $region33: #{head_decode.1} parent=31 // pred_check
          %p250 = pneg %p62
        $region34: #{head_decode.1} parent=31 // pred_check_branch
          %252 = sbr.rel (%p250) target = $region36
        $region35: #{head_decode.1} parent=31 // pred_region
          %p253 = scmp.lt.s32.totalorder %s21, 3
          %s254 = scalar_select %p253, %s21, 3
          %s255 = smul.addr %s254, 2
          %s256 = scalar_lea.vmem %s1, %s255
        $region36: #{head_decode.1} parent=31 // pred_fallthru
          _
      $region32: #{head_decode.1} parent=5 // pred_fallthru
        _
      %p257 = scmp.le.s32.totalorder 1, %s21
      %p258 = scmp.lt.s32.totalorder %s21, 5
      %p259 = pnand %p257, %p258
      %p260 = pneg %p259
      // Predicated region
      $region37: #{head_decode.1} parent=5 // pred_check
        _
      $region38: #{head_decode.1} parent=5 // pred_check_branch
        %262 = sbr.rel (%p259) target = $region40
      $region39: #{head_decode.1} parent=5 // pred_region
        %s263 = ssub.s32 %s21, 1
        // Predicated region
        $region41: #{head_decode.1} parent=39 // pred_check
          %p264 = pneg %p110
        $region42: #{head_decode.1} parent=39 // pred_check_branch
          %266 = sbr.rel (%p264) target = $region44
        $region43: #{head_decode.1} parent=39 // pred_region
          %267 = dma.done [#allocation4], 256
        $region44: #{head_decode.1} parent=39 // pred_fallthru
          _
        // Predicated region
        $region45: #{head_decode.1} parent=39 // pred_check
          %p268 = pneg %p131
        $region46: #{head_decode.1} parent=39 // pred_check_branch
          %270 = sbr.rel (%p268) target = $region48
        $region47: #{head_decode.1} parent=39 // pred_region
          %271 = dma.done [#allocation7], 256
        $region48: #{head_decode.1} parent=39 // pred_fallthru
          _
        %p272 = pneg %p42
        %p273 = pneg %p39
        %p274 = scmp.lt.s32.totalorder %s26, 3
        %s275 = scalar_select %p274, %s26, 3
        %s276 = smul.addr %s275, 2
        %s277 = scalar_lea.vmem %s1, %s276
        %p278 = pneg %p68
        %p279 = pneg %p65
        %p280 = pneg %p89
        %p281 = pneg %p86
        %p282 = pneg %p110
        %p283 = pneg %p107
        %p284 = pneg %p131
        %p285 = pneg %p128
        %p286 = pneg %p157
        %p287 = pneg %p154
        %s288 = sand.u32 %s144, 1
        %s289 = scalar_lea.sflag [#allocation5], %s288
        %s290 = sand.u32 %s144, 1
        %s291 = smul.addr %s290, 2
        %s292 = scalar_lea.vmem [#allocation8], %s291
        %p293 = pneg %p178
        %p294 = pneg %p175
        %p295 = pneg %p199
        %p296 = pneg %p196
        %p297 = scmp.lt.s32.totalorder %s26, 3
        %s298 = scalar_select %p297, %s26, 3
        %s299 = smul.addr %s298, 2
        %s300 = scalar_lea.vmem %s1, %s299
        %p301 = scmp.eq.s32.totalorder %s26, 0
        // Predicated region
        $region49: #{head_decode.1} parent=39 // pred_check
          %p302 = pneg %p301
        $region50: #{head_decode.1} parent=39 // pred_check_branch
          %304 = sbr.rel (%p302) target = $region52
        $region51: #{head_decode.1} parent=39 // pred_region
          %v305 = vld [vmem:[#allocation3] sm:$0xff]
          %v306 = vld [vmem:[#allocation3 + $0x8] sm:$0xff]
          %vm307 = vcmask 130048
          %308 = vst.msk [vmem:[#allocation9] sm:$0xff] %vm307, %v305
          %309 = vst.msk [vmem:[#allocation9 + $0x8] sm:$0xff] %vm307, %v306
          %v310 = vld [vmem:[#allocation6] sm:$0xff]
          %v311 = vld [vmem:[#allocation6 + $0x8] sm:$0xff]
          %312 = vst.msk [vmem:[#allocation11] sm:$0xff] %vm307, %v310
          %313 = vst.msk [vmem:[#allocation11 + $0x8] sm:$0xff] %vm307, %v311
        $region52: #{head_decode.1} parent=39 // pred_fallthru
          _
        %s314 = sld [smem:[#allocation2]]
        %s315 = sadd.s32 %s314, %s26
        %v316 = vld [vmem:[%s300] sm:$0x3]
        %v317 = vld [vmem:[%s2] sm:$0xff]
        %v318 = vld [vmem:[%s2 + $0x8] sm:$0xff]
        %v319 = vld [vmem:[%s2 + $0x10] sm:$0xff]
        %v320 = vld [vmem:[%s2 + $0x18] sm:$0xff]
        %v321 = vld [vmem:[%s2 + $0x20] sm:$0xff]
        %v322 = vld [vmem:[%s2 + $0x28] sm:$0xff]
        %v325 = vunpack.c.l.s4 1966171168
        %v326 = vunpack.c.0.s8 %v325
        %v327 = vlaneseq
        %v328 = vshrl.u32 %v327, 7
        %v329 = vsub.s32 %v326, %v328
        %v330 = vrot.slane %v316, %v329
        %v331 = vcombine.high %v330, %v330
        %v333 = vunpack.c.l.s4 1966171168
        %v334 = vunpack.c.0.s8 %v333
        %v335 = vlaneseq
        %v336 = vshrl.u32 %v335, 7
        %v337 = vsub.s32 %v334, %v336
        %v338 = vrot.slane %v330, %v337
        %v340 = vunpack.c.l.s4 1966171168
        %v341 = vunpack.c.0.s8 %v340
        %v342 = vlaneseq
        %v343 = vshrl.u32 %v342, 7
        %v344 = vsub.s32 %v341, %v343
        %v345 = vrot.slane %v331, %v344
        %v346 = vlaneseq
        %v347 = vshrl.u32 %v346, 7
        %v348 = vsub.s32 0, %v347
        %v349 = vrot.slane %v338, %v348
        %v350 = vlaneseq
        %v351 = vshrl.u32 %v350, 7
        %v352 = vsub.s32 0, %v351
        %v353 = vrot.slane %v345, %v352
        %v356 = vmul.f32 %v349, %v317
        %v357 = vmul.f32 %v349, %v318
        %v358 = vmul.f32 %v349, %v319
        %v359 = vmul.f32 %v349, %v320
        %v360 = vmul.f32 %v349, %v321
        %v361 = vmul.f32 %v349, %v322
        %v362 = vmul.f32 %v353, %v317
        %v363 = vmul.f32 %v353, %v318
        %v364 = vmul.f32 %v353, %v319
        %v365 = vmul.f32 %v353, %v320
        %v366 = vmul.f32 %v353, %v321
        %v367 = vmul.f32 %v353, %v322
        %vm368 = vcmask 261120
        %v369 = vsel %vm368, %v356, 0.0
        %370 = vadd.xlane.f32.xlu0 %v369
        %v371 = vpop.xlane.xlu0 %370
        %v372 = vsel %vm368, %v357, 0.0
        %373 = vadd.xlane.f32.xlu0 %v372
        %v374 = vpop.xlane.xlu0 %373
        %v375 = vsel %vm368, %v358, 0.0
        %376 = vadd.xlane.f32.xlu0 %v375
        %v377 = vpop.xlane.xlu0 %376
        %v378 = vsel %vm368, %v359, 0.0
        %379 = vadd.xlane.f32.xlu0 %v378
        %v380 = vpop.xlane.xlu0 %379
        %v381 = vsel %vm368, %v360, 0.0
        %382 = vadd.xlane.f32.xlu0 %v381
        %v383 = vpop.xlane.xlu0 %382
        %v384 = vsel %vm368, %v361, 0.0
        %385 = vadd.xlane.f32.xlu0 %v384
        %v386 = vpop.xlane.xlu0 %385
        %v387 = vsel %vm368, %v362, 0.0
        %388 = vadd.xlane.f32.xlu0 %v387
        %v389 = vpop.xlane.xlu0 %388
        %v390 = vsel %vm368, %v363, 0.0
        %391 = vadd.xlane.f32.xlu0 %v390
        %v392 = vpop.xlane.xlu0 %391
        %v393 = vsel %vm368, %v364, 0.0
        %394 = vadd.xlane.f32.xlu0 %v393
        %v395 = vpop.xlane.xlu0 %394
        %v396 = vsel %vm368, %v365, 0.0
        %397 = vadd.xlane.f32.xlu0 %v396
        %v398 = vpop.xlane.xlu0 %397
        %v399 = vsel %vm368, %v366, 0.0
        %400 = vadd.xlane.f32.xlu0 %v399
        %v401 = vpop.xlane.xlu0 %400
        %v402 = vsel %vm368, %v367, 0.0
        %403 = vadd.xlane.f32.xlu0 %v402
        %v404 = vpop.xlane.xlu0 %403
        %v405 = vlaneseq
        %v406 = vshrl.u32 %v405, 7
        %v407 = vstv %s315
        %vm408 = vcmp.eq.s32.totalorder %v406, %v407
        %v409 = vld [vmem:[#allocation9] sm:$0xff]
        %v410 = vld [vmem:[#allocation9 + $0x8] sm:$0xff]
        %v415 = vlaneseq
        %v416 = vand.u32 %v415, 127
        %v417 = vlaneseq
        %v418 = vshrl.u32 %v417, 7
        %v419 = vsub.s32 %v416, %v418
        %v420 = vrot.slane %v377, %v419
        %v421 = vadd.s32 %v416, 4294967288
        %v422 = vlaneseq
        %v423 = vshrl.u32 %v422, 7
        %v424 = vsub.s32 %v421, %v423
        %v425 = vrot.slane %v380, %v424
        %vm426 = vcmask 130112
        %v427 = vsel %vm426, %v425, %v420
        %v428 = vlaneseq
        %v429 = vshrl.u32 %v428, 7
        %v430 = vsub.s32 %v416, %v429
        %v431 = vrot.slane %v395, %v430
        %v432 = vlaneseq
        %v433 = vshrl.u32 %v432, 7
        %v434 = vsub.s32 %v421, %v433
        %v435 = vrot.slane %v398, %v434
        %v436 = vsel %vm426, %v435, %v431
        %vm437 = vcmask 1041409
        %vm438 = vcmask 1042434
        %v439 = vsel %vm438, %v427, %v427
        %vm440 = vcmask 1043459
        %v441 = vsel %vm440, %v427, %v439
        %vm442 = vcmask 1044484
        %v443 = vsel %vm442, %v427, %v441
        %vm444 = vcmask 1045509
        %v445 = vsel %vm444, %v427, %v443
        %vm446 = vcmask 1046534
        %v447 = vsel %vm446, %v427, %v445
        %vm448 = vcmask 1047559
        %v449 = vsel %vm448, %v427, %v447
        %v450 = vsel %vm438, %v436, %v436
        %v451 = vsel %vm440, %v436, %v450
        %v452 = vsel %vm442, %v436, %v451
        %v453 = vsel %vm444, %v436, %v452
        %v454 = vsel %vm446, %v436, %v453
        %v455 = vsel %vm448, %v436, %v454
        %v458 = vsel %vm408, %v449, %v409
        %v459 = vsel %vm408, %v455, %v410
        %v460 = vld [vmem:[#allocation11] sm:$0xff]
        %v461 = vld [vmem:[#allocation11 + $0x8] sm:$0xff]
        %v466 = vlaneseq
        %v467 = vshrl.u32 %v466, 7
        %v468 = vsub.s32 %v416, %v467
        %v469 = vrot.slane %v383, %v468
        %v470 = vlaneseq
        %v471 = vshrl.u32 %v470, 7
        %v472 = vsub.s32 %v421, %v471
        %v473 = vrot.slane %v386, %v472
        %v474 = vsel %vm426, %v473, %v469
        %v475 = vlaneseq
        %v476 = vshrl.u32 %v475, 7
        %v477 = vsub.s32 %v416, %v476
        %v478 = vrot.slane %v401, %v477
        %v479 = vlaneseq
        %v480 = vshrl.u32 %v479, 7
        %v481 = vsub.s32 %v421, %v480
        %v482 = vrot.slane %v404, %v481
        %v483 = vsel %vm426, %v482, %v478
        %v484 = vsel %vm438, %v474, %v474
        %v485 = vsel %vm440, %v474, %v484
        %v486 = vsel %vm442, %v474, %v485
        %v487 = vsel %vm444, %v474, %v486
        %v488 = vsel %vm446, %v474, %v487
        %v489 = vsel %vm448, %v474, %v488
        %v490 = vsel %vm438, %v483, %v483
        %v491 = vsel %vm440, %v483, %v490
        %v492 = vsel %vm442, %v483, %v491
        %v493 = vsel %vm444, %v483, %v492
        %v494 = vsel %vm446, %v483, %v493
        %v495 = vsel %vm448, %v483, %v494
        %v498 = vsel %vm408, %v489, %v460
        %v499 = vsel %vm408, %v495, %v461
        %vm500 = vcmask 130048
        %501 = vst.msk [vmem:[#allocation9] sm:$0xff] %vm500, %v458
        %502 = vst.msk [vmem:[#allocation9 + $0x8] sm:$0xff] %vm500, %v459
        %503 = vst.msk [vmem:[#allocation11] sm:$0xff] %vm500, %v498
        %504 = vst.msk [vmem:[#allocation11 + $0x8] sm:$0xff] %vm500, %v499
        %v507 = vlaneseq
        %v508 = vshrl.u32 %v507, 7
        %v509 = vsub.s32 0, %v508
        %v510 = vrot.slane %v458, %v509
        %512 = vbcast.lane.b32.xlu0 %v510, 256
        %v513 = vpop.permute.xlu0 %512
        %s515 = sor.u32 256, 8
        %516 = vbcast.lane.b32.xlu0 %v510, %s515
        %v517 = vpop.permute.xlu0 %516
        %v518 = vlaneseq
        %v519 = vshrl.u32 %v518, 7
        %v520 = vsub.s32 1, %v519
        %v521 = vrot.slane %v458, %v520
        %523 = vbcast.lane.b32.xlu0 %v521, 256
        %v524 = vpop.permute.xlu0 %523
        %s526 = sor.u32 256, 8
        %527 = vbcast.lane.b32.xlu0 %v521, %s526
        %v528 = vpop.permute.xlu0 %527
        %v529 = vlaneseq
        %v530 = vshrl.u32 %v529, 7
        %v531 = vsub.s32 2, %v530
        %v532 = vrot.slane %v458, %v531
        %534 = vbcast.lane.b32.xlu0 %v532, 256
        %v535 = vpop.permute.xlu0 %534
        %s537 = sor.u32 256, 8
        %538 = vbcast.lane.b32.xlu0 %v532, %s537
        %v539 = vpop.permute.xlu0 %538
        %v540 = vlaneseq
        %v541 = vshrl.u32 %v540, 7
        %v542 = vsub.s32 3, %v541
        %v543 = vrot.slane %v458, %v542
        %545 = vbcast.lane.b32.xlu0 %v543, 256
        %v546 = vpop.permute.xlu0 %545
        %s548 = sor.u32 256, 8
        %549 = vbcast.lane.b32.xlu0 %v543, %s548
        %v550 = vpop.permute.xlu0 %549
        %v551 = vlaneseq
        %v552 = vshrl.u32 %v551, 7
        %v553 = vsub.s32 4, %v552
        %v554 = vrot.slane %v458, %v553
        %556 = vbcast.lane.b32.xlu0 %v554, 256
        %v557 = vpop.permute.xlu0 %556
        %s559 = sor.u32 256, 8
        %560 = vbcast.lane.b32.xlu0 %v554, %s559
        %v561 = vpop.permute.xlu0 %560
        %v562 = vlaneseq
        %v563 = vshrl.u32 %v562, 7
        %v564 = vsub.s32 5, %v563
        %v565 = vrot.slane %v458, %v564
        %567 = vbcast.lane.b32.xlu0 %v565, 256
        %v568 = vpop.permute.xlu0 %567
        %s570 = sor.u32 256, 8
        %571 = vbcast.lane.b32.xlu0 %v565, %s570
        %v572 = vpop.permute.xlu0 %571
        %v573 = vlaneseq
        %v574 = vshrl.u32 %v573, 7
        %v575 = vsub.s32 6, %v574
        %v576 = vrot.slane %v458, %v575
        %578 = vbcast.lane.b32.xlu0 %v576, 256
        %v579 = vpop.permute.xlu0 %578
        %s581 = sor.u32 256, 8
        %582 = vbcast.lane.b32.xlu0 %v576, %s581
        %v583 = vpop.permute.xlu0 %582
        %v584 = vlaneseq
        %v585 = vshrl.u32 %v584, 7
        %v586 = vsub.s32 7, %v585
        %v587 = vrot.slane %v458, %v586
        %589 = vbcast.lane.b32.xlu0 %v587, 256
        %v590 = vpop.permute.xlu0 %589
        %s592 = sor.u32 256, 8
        %593 = vbcast.lane.b32.xlu0 %v587, %s592
        %v594 = vpop.permute.xlu0 %593
        %v595 = vlaneseq
        %v596 = vshrl.u32 %v595, 7
        %v597 = vsub.s32 0, %v596
        %v598 = vrot.slane %v459, %v597
        %600 = vbcast.lane.b32.xlu0 %v598, 256
        %v601 = vpop.permute.xlu0 %600
        %s603 = sor.u32 256, 8
        %604 = vbcast.lane.b32.xlu0 %v598, %s603
        %v605 = vpop.permute.xlu0 %604
        %v606 = vlaneseq
        %v607 = vshrl.u32 %v606, 7
        %v608 = vsub.s32 1, %v607
        %v609 = vrot.slane %v459, %v608
        %611 = vbcast.lane.b32.xlu0 %v609, 256
        %v612 = vpop.permute.xlu0 %611
        %s614 = sor.u32 256, 8
        %615 = vbcast.lane.b32.xlu0 %v609, %s614
        %v616 = vpop.permute.xlu0 %615
        %v617 = vlaneseq
        %v618 = vshrl.u32 %v617, 7
        %v619 = vsub.s32 2, %v618
        %v620 = vrot.slane %v459, %v619
        %622 = vbcast.lane.b32.xlu0 %v620, 256
        %v623 = vpop.permute.xlu0 %622
        %s625 = sor.u32 256, 8
        %626 = vbcast.lane.b32.xlu0 %v620, %s625
        %v627 = vpop.permute.xlu0 %626
        %v628 = vlaneseq
        %v629 = vshrl.u32 %v628, 7
        %v630 = vsub.s32 3, %v629
        %v631 = vrot.slane %v459, %v630
        %633 = vbcast.lane.b32.xlu0 %v631, 256
        %v634 = vpop.permute.xlu0 %633
        %s636 = sor.u32 256, 8
        %637 = vbcast.lane.b32.xlu0 %v631, %s636
        %v638 = vpop.permute.xlu0 %637
        %v639 = vlaneseq
        %v640 = vshrl.u32 %v639, 7
        %v641 = vsub.s32 4, %v640
        %v642 = vrot.slane %v459, %v641
        %644 = vbcast.lane.b32.xlu0 %v642, 256
        %v645 = vpop.permute.xlu0 %644
        %s647 = sor.u32 256, 8
        %648 = vbcast.lane.b32.xlu0 %v642, %s647
        %v649 = vpop.permute.xlu0 %648
        %v650 = vlaneseq
        %v651 = vshrl.u32 %v650, 7
        %v652 = vsub.s32 5, %v651
        %v653 = vrot.slane %v459, %v652
        %655 = vbcast.lane.b32.xlu0 %v653, 256
        %v656 = vpop.permute.xlu0 %655
        %s658 = sor.u32 256, 8
        %659 = vbcast.lane.b32.xlu0 %v653, %s658
        %v660 = vpop.permute.xlu0 %659
        %v661 = vlaneseq
        %v662 = vshrl.u32 %v661, 7
        %v663 = vsub.s32 6, %v662
        %v664 = vrot.slane %v459, %v663
        %666 = vbcast.lane.b32.xlu0 %v664, 256
        %v667 = vpop.permute.xlu0 %666
        %s669 = sor.u32 256, 8
        %670 = vbcast.lane.b32.xlu0 %v664, %s669
        %v671 = vpop.permute.xlu0 %670
        %v672 = vlaneseq
        %v673 = vshrl.u32 %v672, 7
        %v674 = vsub.s32 7, %v673
        %v675 = vrot.slane %v459, %v674
        %677 = vbcast.lane.b32.xlu0 %v675, 256
        %v678 = vpop.permute.xlu0 %677
        %s680 = sor.u32 256, 8
        %681 = vbcast.lane.b32.xlu0 %v675, %s680
        %v682 = vpop.permute.xlu0 %681
        %v715 = vmul.f32 %v371, %v513
        %v716 = vmul.f32 %v374, %v517
        %v717 = vmul.f32 %v371, %v524
        %v718 = vmul.f32 %v374, %v528
        %v719 = vmul.f32 %v371, %v535
        %v720 = vmul.f32 %v374, %v539
        %v721 = vmul.f32 %v371, %v546
        %v722 = vmul.f32 %v374, %v550
        %v723 = vmul.f32 %v371, %v557
        %v724 = vmul.f32 %v374, %v561
        %v725 = vmul.f32 %v371, %v568
        %v726 = vmul.f32 %v374, %v572
        %v727 = vmul.f32 %v371, %v579
        %v728 = vmul.f32 %v374, %v583
        %v729 = vmul.f32 %v371, %v590
        %v730 = vmul.f32 %v374, %v594
        %v731 = vmul.f32 %v389, %v601
        %v732 = vmul.f32 %v392, %v605
        %v733 = vmul.f32 %v389, %v612
        %v734 = vmul.f32 %v392, %v616
        %v735 = vmul.f32 %v389, %v623
        %v736 = vmul.f32 %v392, %v627
        %v737 = vmul.f32 %v389, %v634
        %v738 = vmul.f32 %v392, %v638
        %v739 = vmul.f32 %v389, %v645
        %v740 = vmul.f32 %v392, %v649
        %v741 = vmul.f32 %v389, %v656
        %v742 = vmul.f32 %v392, %v660
        %v743 = vmul.f32 %v389, %v667
        %v744 = vmul.f32 %v392, %v671
        %v745 = vmul.f32 %v389, %v678
        %v746 = vmul.f32 %v392, %v682
        %779 = vset.pattern.permute.xlu0 0
        %780 = vperm.xlu0 %779, %v715
        %v781 = vpop.permute.xlu0 %780
        %782 = vset.pattern.permute.xlu0 0
        %783 = vperm.xlu0 %782, %v716
        %v784 = vpop.permute.xlu0 %783
        %785 = vset.pattern.permute.xlu0 0
        %786 = vperm.xlu0 %785, %v717
        %v787 = vpop.permute.xlu0 %786
        %788 = vset.pattern.permute.xlu0 0
        %789 = vperm.xlu0 %788, %v718
        %v790 = vpop.permute.xlu0 %789
        %791 = vset.pattern.permute.xlu0 0
        %792 = vperm.xlu0 %791, %v719
        %v793 = vpop.permute.xlu0 %792
        %794 = vset.pattern.permute.xlu0 0
        %795 = vperm.xlu0 %794, %v720
        %v796 = vpop.permute.xlu0 %795
        %797 = vset.pattern.permute.xlu0 0
        %798 = vperm.xlu0 %797, %v721
        %v799 = vpop.permute.xlu0 %798
        %800 = vset.pattern.permute.xlu0 0
        %801 = vperm.xlu0 %800, %v722
        %v802 = vpop.permute.xlu0 %801
        %803 = vset.pattern.permute.xlu0 0
        %804 = vperm.xlu0 %803, %v723
        %v805 = vpop.permute.xlu0 %804
        %806 = vset.pattern.permute.xlu0 0
        %807 = vperm.xlu0 %806, %v724
        %v808 = vpop.permute.xlu0 %807
        %809 = vset.pattern.permute.xlu0 0
        %810 = vperm.xlu0 %809, %v725
        %v811 = vpop.permute.xlu0 %810
        %812 = vset.pattern.permute.xlu0 0
        %813 = vperm.xlu0 %812, %v726
        %v814 = vpop.permute.xlu0 %813
        %815 = vset.pattern.permute.xlu0 0
        %816 = vperm.xlu0 %815, %v727
        %v817 = vpop.permute.xlu0 %816
        %818 = vset.pattern.permute.xlu0 0
        %819 = vperm.xlu0 %818, %v728
        %v820 = vpop.permute.xlu0 %819
        %821 = vset.pattern.permute.xlu0 0
        %822 = vperm.xlu0 %821, %v729
        %v823 = vpop.permute.xlu0 %822
        %824 = vset.pattern.permute.xlu0 0
        %825 = vperm.xlu0 %824, %v730
        %v826 = vpop.permute.xlu0 %825
        %827 = vset.pattern.permute.xlu0 0
        %828 = vperm.xlu0 %827, %v731
        %v829 = vpop.permute.xlu0 %828
        %830 = vset.pattern.permute.xlu0 0
        %831 = vperm.xlu0 %830, %v732
        %v832 = vpop.permute.xlu0 %831
        %833 = vset.pattern.permute.xlu0 0
        %834 = vperm.xlu0 %833, %v733
        %v835 = vpop.permute.xlu0 %834
        %836 = vset.pattern.permute.xlu0 0
        %837 = vperm.xlu0 %836, %v734
        %v838 = vpop.permute.xlu0 %837
        %839 = vset.pattern.permute.xlu0 0
        %840 = vperm.xlu0 %839, %v735
        %v841 = vpop.permute.xlu0 %840
        %842 = vset.pattern.permute.xlu0 0
        %843 = vperm.xlu0 %842, %v736
        %v844 = vpop.permute.xlu0 %843
        %845 = vset.pattern.permute.xlu0 0
        %846 = vperm.xlu0 %845, %v737
        %v847 = vpop.permute.xlu0 %846
        %848 = vset.pattern.permute.xlu0 0
        %849 = vperm.xlu0 %848, %v738
        %v850 = vpop.permute.xlu0 %849
        %851 = vset.pattern.permute.xlu0 0
        %852 = vperm.xlu0 %851, %v739
        %v853 = vpop.permute.xlu0 %852
        %854 = vset.pattern.permute.xlu0 0
        %855 = vperm.xlu0 %854, %v740
        %v856 = vpop.permute.xlu0 %855
        %857 = vset.pattern.permute.xlu0 0
        %858 = vperm.xlu0 %857, %v741
        %v859 = vpop.permute.xlu0 %858
        %860 = vset.pattern.permute.xlu0 0
        %861 = vperm.xlu0 %860, %v742
        %v862 = vpop.permute.xlu0 %861
        %863 = vset.pattern.permute.xlu0 0
        %864 = vperm.xlu0 %863, %v743
        %v865 = vpop.permute.xlu0 %864
        %866 = vset.pattern.permute.xlu0 0
        %867 = vperm.xlu0 %866, %v744
        %v868 = vpop.permute.xlu0 %867
        %869 = vset.pattern.permute.xlu0 0
        %870 = vperm.xlu0 %869, %v745
        %v871 = vpop.permute.xlu0 %870
        %872 = vset.pattern.permute.xlu0 0
        %873 = vperm.xlu0 %872, %v746
        %v874 = vpop.permute.xlu0 %873
        %v875 = vlaneseq
        %v876 = vshrl.u32 %v875, 7
        %v877 = vsub.s32 %v416, %v876
        %v878 = vrot.slane %v781, %v877
        %v879 = vlaneseq
        %v880 = vshrl.u32 %v879, 7
        %v881 = vsub.s32 %v421, %v880
        %v882 = vrot.slane %v784, %v881
        %v883 = vsel %vm426, %v882, %v878
        %v884 = vlaneseq
        %v885 = vshrl.u32 %v884, 7
        %v886 = vsub.s32 %v416, %v885
        %v887 = vrot.slane %v787, %v886
        %v888 = vlaneseq
        %v889 = vshrl.u32 %v888, 7
        %v890 = vsub.s32 %v421, %v889
        %v891 = vrot.slane %v790, %v890
        %v892 = vsel %vm426, %v891, %v887
        %v893 = vlaneseq
        %v894 = vshrl.u32 %v893, 7
        %v895 = vsub.s32 %v416, %v894
        %v896 = vrot.slane %v793, %v895
        %v897 = vlaneseq
        %v898 = vshrl.u32 %v897, 7
        %v899 = vsub.s32 %v421, %v898
        %v900 = vrot.slane %v796, %v899
        %v901 = vsel %vm426, %v900, %v896
        %v902 = vlaneseq
        %v903 = vshrl.u32 %v902, 7
        %v904 = vsub.s32 %v416, %v903
        %v905 = vrot.slane %v799, %v904
        %v906 = vlaneseq
        %v907 = vshrl.u32 %v906, 7
        %v908 = vsub.s32 %v421, %v907
        %v909 = vrot.slane %v802, %v908
        %v910 = vsel %vm426, %v909, %v905
        %v911 = vlaneseq
        %v912 = vshrl.u32 %v911, 7
        %v913 = vsub.s32 %v416, %v912
        %v914 = vrot.slane %v805, %v913
        %v915 = vlaneseq
        %v916 = vshrl.u32 %v915, 7
        %v917 = vsub.s32 %v421, %v916
        %v918 = vrot.slane %v808, %v917
        %v919 = vsel %vm426, %v918, %v914
        %v920 = vlaneseq
        %v921 = vshrl.u32 %v920, 7
        %v922 = vsub.s32 %v416, %v921
        %v923 = vrot.slane %v811, %v922
        %v924 = vlaneseq
        %v925 = vshrl.u32 %v924, 7
        %v926 = vsub.s32 %v421, %v925
        %v927 = vrot.slane %v814, %v926
        %v928 = vsel %vm426, %v927, %v923
        %v929 = vlaneseq
        %v930 = vshrl.u32 %v929, 7
        %v931 = vsub.s32 %v416, %v930
        %v932 = vrot.slane %v817, %v931
        %v933 = vlaneseq
        %v934 = vshrl.u32 %v933, 7
        %v935 = vsub.s32 %v421, %v934
        %v936 = vrot.slane %v820, %v935
        %v937 = vsel %vm426, %v936, %v932
        %v938 = vlaneseq
        %v939 = vshrl.u32 %v938, 7
        %v940 = vsub.s32 %v416, %v939
        %v941 = vrot.slane %v823, %v940
        %v942 = vlaneseq
        %v943 = vshrl.u32 %v942, 7
        %v944 = vsub.s32 %v421, %v943
        %v945 = vrot.slane %v826, %v944
        %v946 = vsel %vm426, %v945, %v941
        %v947 = vlaneseq
        %v948 = vshrl.u32 %v947, 7
        %v949 = vsub.s32 %v416, %v948
        %v950 = vrot.slane %v829, %v949
        %v951 = vlaneseq
        %v952 = vshrl.u32 %v951, 7
        %v953 = vsub.s32 %v421, %v952
        %v954 = vrot.slane %v832, %v953
        %v955 = vsel %vm426, %v954, %v950
        %v956 = vlaneseq
        %v957 = vshrl.u32 %v956, 7
        %v958 = vsub.s32 %v416, %v957
        %v959 = vrot.slane %v835, %v958
        %v960 = vlaneseq
        %v961 = vshrl.u32 %v960, 7
        %v962 = vsub.s32 %v421, %v961
        %v963 = vrot.slane %v838, %v962
        %v964 = vsel %vm426, %v963, %v959
        %v965 = vlaneseq
        %v966 = vshrl.u32 %v965, 7
        %v967 = vsub.s32 %v416, %v966
        %v968 = vrot.slane %v841, %v967
        %v969 = vlaneseq
        %v970 = vshrl.u32 %v969, 7
        %v971 = vsub.s32 %v421, %v970
        %v972 = vrot.slane %v844, %v971
        %v973 = vsel %vm426, %v972, %v968
        %v974 = vlaneseq
        %v975 = vshrl.u32 %v974, 7
        %v976 = vsub.s32 %v416, %v975
        %v977 = vrot.slane %v847, %v976
        %v978 = vlaneseq
        %v979 = vshrl.u32 %v978, 7
        %v980 = vsub.s32 %v421, %v979
        %v981 = vrot.slane %v850, %v980
        %v982 = vsel %vm426, %v981, %v977
        %v983 = vlaneseq
        %v984 = vshrl.u32 %v983, 7
        %v985 = vsub.s32 %v416, %v984
        %v986 = vrot.slane %v853, %v985
        %v987 = vlaneseq
        %v988 = vshrl.u32 %v987, 7
        %v989 = vsub.s32 %v421, %v988
        %v990 = vrot.slane %v856, %v989
        %v991 = vsel %vm426, %v990, %v986
        %v992 = vlaneseq
        %v993 = vshrl.u32 %v992, 7
        %v994 = vsub.s32 %v416, %v993
        %v995 = vrot.slane %v859, %v994
        %v996 = vlaneseq
        %v997 = vshrl.u32 %v996, 7
        %v998 = vsub.s32 %v421, %v997
        %v999 = vrot.slane %v862, %v998
        %v1000 = vsel %vm426, %v999, %v995
        %v1001 = vlaneseq
        %v1002 = vshrl.u32 %v1001, 7
        %v1003 = vsub.s32 %v416, %v1002
        %v1004 = vrot.slane %v865, %v1003
        %v1005 = vlaneseq
        %v1006 = vshrl.u32 %v1005, 7
        %v1007 = vsub.s32 %v421, %v1006
        %v1008 = vrot.slane %v868, %v1007
        %v1009 = vsel %vm426, %v1008, %v1004
        %v1010 = vlaneseq
        %v1011 = vshrl.u32 %v1010, 7
        %v1012 = vsub.s32 %v416, %v1011
        %v1013 = vrot.slane %v871, %v1012
        %v1014 = vlaneseq
        %v1015 = vshrl.u32 %v1014, 7
        %v1016 = vsub.s32 %v421, %v1015
        %v1017 = vrot.slane %v874, %v1016
        %v1018 = vsel %vm426, %v1017, %v1013
        %v1019 = vsel %vm437, %v892, %v883
        %v1020 = vsel %vm438, %v901, %v1019
        %v1021 = vsel %vm440, %v910, %v1020
        %v1022 = vsel %vm442, %v919, %v1021
        %v1023 = vsel %vm444, %v928, %v1022
        %v1024 = vsel %vm446, %v937, %v1023
        %v1025 = vsel %vm448, %v946, %v1024
        %v1026 = vsel %vm437, %v964, %v955
        %v1027 = vsel %vm438, %v973, %v1026
        %v1028 = vsel %vm440, %v982, %v1027
        %v1029 = vsel %vm442, %v991, %v1028
        %v1030 = vsel %vm444, %v1000, %v1029
        %v1031 = vsel %vm446, %v1009, %v1030
        %v1032 = vsel %vm448, %v1018, %v1031
        %v1035 = vsel %vm500, %v1025, 0.0
        %1036 = vadd.xlane.f32.xlu0 %v1035
        %v1037 = vpop.xlane.xlu0 %1036
        %v1038 = vsel %vm500, %v1032, 0.0
        %1039 = vadd.xlane.f32.xlu0 %v1038
        %v1040 = vpop.xlane.xlu0 %1039
        %v1041 = vadd.f32 %v1037, 0.17677669
        %v1042 = vadd.f32 %v1040, 0.17677669
        %vm1043 = vcmp.gt.s32.totalorder %v416, %v407
        %v1046 = vlaneseq
        %v1047 = vshrl.u32 %v1046, 7
        %v1048 = vsub.s32 %v416, %v1047
        %v1049 = vrot.slane %v1041, %v1048
        %v1050 = vlaneseq
        %v1051 = vshrl.u32 %v1050, 7
        %v1052 = vsub.s32 %v416, %v1051
        %v1053 = vrot.slane %v1042, %v1052
        %v1054 = vsel %vm437, %v1053, %v1049
        %v1056 = vsel %vm1043, -1e+30, %v1054
        %vm1057 = vcmask 58368
        %v1058 = vsel %vm1057, %v1056, -inf
        %1059 = vmax.xlane.f32.xlu0 %v1058
        %v1060 = vpop.xlane.xlu0 %1059
        %v1061 = vsub.f32 %v1056, %v1060
        %v1062 = vmul.f32 %v1061, 1.442695
        %v1063 = vpow.pop %v1062
        %v1064 = vsel %vm1057, %v1063, 0.0
        %1065 = vadd.xlane.f32.xlu0 %v1064
        %v1066 = vpop.xlane.xlu0 %1065
        %v1067 = vrcp.pop %v1066
        %v1068 = vmul.f32 %v1063, %v1067
        %v1069 = vlaneseq
        %v1070 = vshrl.u32 %v1069, 7
        %v1071 = vsub.s32 0, %v1070
        %v1072 = vrot.slane %v1068, %v1071
        %1074 = vbcast.lane.b32.xlu0 %v1072, 256
        %v1075 = vpop.permute.xlu0 %1074
        %v1076 = vlaneseq
        %v1077 = vshrl.u32 %v1076, 7
        %v1078 = vsub.s32 1, %v1077
        %v1079 = vrot.slane %v1068, %v1078
        %1081 = vbcast.lane.b32.xlu0 %v1079, 256
        %v1082 = vpop.permute.xlu0 %1081
        %v1083 = vmul.f32 %v1075, %v498
        %v1084 = vmul.f32 %v1082, %v499
        %v1085 = vsel %vm500, %v1083, 0.0
        %v1086 = vrot.slane %v1085, 4
        %v1087 = vadd.f32 %v1085, %v1086
        %v1088 = vrot.slane %v1087, 2
        %v1089 = vadd.f32 %v1087, %v1088
        %v1090 = vrot.slane %v1089, 1
        %v1091 = vadd.f32 %v1089, %v1090
        %v1092 = vsel %vm500, %v1084, 0.0
        %v1093 = vrot.slane %v1092, 4
        %v1094 = vadd.f32 %v1092, %v1093
        %v1095 = vrot.slane %v1094, 2
        %v1096 = vadd.f32 %v1094, %v1095
        %v1097 = vrot.slane %v1096, 1
        %v1098 = vadd.f32 %v1096, %v1097
        %v1101 = vsel %vm437, %v1098, %v1091
        %vm1103 = vcmask 123904
        %1104 = vst.msk [vmem:[%s292] sm:$0x3] %vm1103, %v1101
        %s1105 = sand.u32 %s144, 1
        %s1106 = scalar_lea.sflag [#allocation5], %s1105
        %s1107 = sand.u32 %s144, 1
        %s1108 = smul.addr %s1107, 2
        %s1109 = scalar_lea.vmem [#allocation8], %s1108
        // Predicated region
        $region53: #{head_decode.1} parent=39 // pred_check
          %p1110 = pneg %p154
        $region54: #{head_decode.1} parent=39 // pred_check_branch
          %1112 = sbr.rel (%p1110) target = $region56
        $region55: #{head_decode.1} parent=39 // pred_region
          %s1114 = ssub.s32 32, 32
          %1115 = vsyncadd %s1106, %s1114
          %s1116 = smul.addr %s26, 32
          %s1117 = scalar_lea.hbm %s5, %s1116
          %s1119 = sshll.u32 %s1109, 4
          %s1120 = int_to_ptr.vmem [resolvable:$true] %s1119
          %1122 = dma.vmem_to_hbm [thread:$0]  %s1120, 32, %s1117, %s1106
        $region56: #{head_decode.1} parent=39 // pred_fallthru
          _
        // Predicated region
        $region57: #{head_decode.1} parent=39 // pred_check
          %p1123 = pneg %p175
        $region58: #{head_decode.1} parent=39 // pred_check_branch
          %1125 = sbr.rel (%p1123) target = $region60
        $region59: #{head_decode.1} parent=39 // pred_region
          %s1127 = ssub.s32 256, 256
          %1128 = vsyncadd [#allocation10], %s1127
          %s1129 = sshll.u32 [#allocation9], 4
          %s1130 = int_to_ptr.vmem [resolvable:$true] %s1129
          %1135 = dma.vmem_to_hbm [thread:$0]  %s1130, 256, %s6, [#allocation10], 128, 128, 8
        $region60: #{head_decode.1} parent=39 // pred_fallthru
          _
        // Predicated region
        $region61: #{head_decode.1} parent=39 // pred_check
          %p1136 = pneg %p196
        $region62: #{head_decode.1} parent=39 // pred_check_branch
          %1138 = sbr.rel (%p1136) target = $region64
        $region63: #{head_decode.1} parent=39 // pred_region
          %s1140 = ssub.s32 256, 256
          %1141 = vsyncadd [#allocation10], %s1140
          %s1142 = sshll.u32 [#allocation11], 4
          %s1143 = int_to_ptr.vmem [resolvable:$true] %s1142
          %1148 = dma.vmem_to_hbm [thread:$0]  %s1143, 256, %s7, [#allocation10], 128, 128, 8
        $region64: #{head_decode.1} parent=39 // pred_fallthru
          _
        // Predicated region
        $region65: #{head_decode.1} parent=39 // pred_check
          %p1149 = pneg %p175
        $region66: #{head_decode.1} parent=39 // pred_check_branch
          %1151 = sbr.rel (%p1149) target = $region68
        $region67: #{head_decode.1} parent=39 // pred_region
          %1152 = dma.done [#allocation10], 256
        $region68: #{head_decode.1} parent=39 // pred_fallthru
          _
        // Predicated region
        $region69: #{head_decode.1} parent=39 // pred_check
          %p1153 = pneg %p196
        $region70: #{head_decode.1} parent=39 // pred_check_branch
          %1155 = sbr.rel (%p1153) target = $region72
        $region71: #{head_decode.1} parent=39 // pred_region
          %1156 = dma.done [#allocation10], 256
        $region72: #{head_decode.1} parent=39 // pred_fallthru
          _
      $region40: #{head_decode.1} parent=5 // pred_fallthru
        _
      %p1157 = scmp.le.s32.totalorder 2, %s21
      // Predicated region
      $region73: #{head_decode.1} parent=5 // pred_check
        %p1158 = pneg %p1157
      $region74: #{head_decode.1} parent=5 // pred_check_branch
        %1160 = sbr.rel (%p1158) target = $region76
      $region75: #{head_decode.1} parent=5 // pred_region
        %s1161 = ssub.s32 %s21, 2
        // Predicated region
        $region77: #{head_decode.1} parent=75 // pred_check
          %p1162 = pneg %p160
        $region78: #{head_decode.1} parent=75 // pred_check_branch
          %1164 = sbr.rel (%p1162) target = $region80
        $region79: #{head_decode.1} parent=75 // pred_region
          %s1165 = sand.u32 %s145, 1
          %s1166 = scalar_lea.sflag [#allocation5], %s1165
          %s1167 = sand.u32 %s145, 1
          %s1168 = smul.addr %s1167, 2
          %s1169 = scalar_lea.vmem [#allocation8], %s1168
          %1170 = dma.done %s1166, 32
        $region80: #{head_decode.1} parent=75 // pred_fallthru
          _
      $region76: #{head_decode.1} parent=5 // pred_fallthru
        _
    $region6: #{head_decode.1} parent=1 // loop_footer
      %s25 = sadd.s32 1, %s21
    $region7: #{head_decode.1} parent=1 // loop_footer_branch
      %20 = sbr.rel target = $region3
    $region8: #{head_decode.1} parent=1 // loop_exit
      _
    %1171 = vsyncpa [#allocation4], 1
    %s1172 = scalar_lea.sflag [#allocation4], 1
    %1173 = vsyncpa %s1172, 1
    %1174 = vsyncpa [#allocation7], 1
    %1175 = vsyncpa [#allocation5], 1
    %s1176 = scalar_lea.sflag [#allocation5], 1
    %1177 = vsyncpa %s1176, 1
    %1178 = vsyncpa [#allocation10], 1

</llo_original>
